<compile_context>
chip_gen: v5e
topology: v5e:2x2
jax: 0.10.0
libtpu: 0.0.40
codegen_flags: <defaults>
</compile_context>

<pallas_src>
import functools

import jax
import jax.numpy as jnp
import numpy as np
from jax.experimental import pallas as pl
from jax.experimental.pallas import tpu as pltpu

LANE = 128


def _round_up(x, m):
    return ((x + m - 1) // m) * m


# ---------------------------------------------------------------------------
# Fused kernel: points head + class head for one tile of tm tokens.
# ---------------------------------------------------------------------------
def fused_projector_kernel(x_ref, w_out_ref, b_out_ref, w_patch_ref,
                           cls_ref, gamma_ref, beta_ref,
                           pts_ref, logits_ref, *, num_classes):
    # x_ref:       [tm, H]      token tile (native activation dtype)
    # w_out_ref:   [H,  O_pad]  output_proj weight, lane-padded with zeros  (compute dtype)
    # b_out_ref:   [1,  O_pad]  f32 bias (padded with zeros)
    # w_patch_ref: [H,  H]      patch_proj weight (y = x @ w)               (compute dtype)
    # cls_ref:     [H,  C_pad]  pre-normalized class matrix, padded cols EXACTLY 0
    # gamma_ref:   [1,  C_pad]  LayerNorm affine, padded with zeros (f32)
    # beta_ref:    [1,  C_pad]
    # pts_ref:     [tm, O_pad]  lane-dense store
    # logits_ref:  [tm, C_pad]  lane-dense store
    cd = w_patch_ref.dtype                       # compute dtype for MXU operands (bf16)
    x = x_ref[...].astype(cd)                    # read tile once, reused by both heads

    # ---- points head: output_proj (Linear with bias), f32 accumulation ----
    pts = jnp.dot(x, w_out_ref[...], preferred_element_type=jnp.float32) + b_out_ref[...]
    pts_ref[...] = pts.astype(pts_ref.dtype)

    # ---- class head: patch_proj + L2 normalize (f32), similarity matmul ----
    patches = jnp.dot(x, w_patch_ref[...], preferred_element_type=jnp.float32)  # (tm, H)
    p_ss = jnp.sum(patches * patches, axis=-1, keepdims=True)
    patches = patches * jax.lax.rsqrt(jnp.maximum(p_ss, 1e-24))                 # EUP rsqrt

    # sim[n, c] = <patches[n, :], cls[:, c]>; padded cols of cls are exact zeros,
    # so padded cols of sim are exact zeros (invariant used by the LN below).
    sim = jnp.dot(patches.astype(cd), cls_ref[...],
                  preferred_element_type=jnp.float32)                           # (tm, C_pad)

    # ---- LayerNorm(num_classes) over the real class columns, one-pass variance ----
    inv_c = 1.0 / num_classes
    mean = jnp.sum(sim, axis=-1, keepdims=True) * inv_c
    var = jnp.maximum(jnp.sum(sim * sim, axis=-1, keepdims=True) * inv_c - mean * mean, 0.0)
    normed = (sim - mean) * jax.lax.rsqrt(var + 1e-5)            # torch LN eps
    # padded gamma/beta are 0 -> padded logits columns end up 0 (sliced away anyway).
    logits_ref[...] = (normed * gamma_ref[...] + beta_ref[...]).astype(logits_ref.dtype)


# ---------------------------------------------------------------------------
# One-time parameter re-layout (hoisted out of the per-call forward path).
# ---------------------------------------------------------------------------
def prepare_projector_params(raw, compute_dtype=jnp.bfloat16):
    """Pad / transpose weights and precompute the batch-invariant class matrix once."""
    H, O = raw["w_out"].shape
    C, T = raw["text_features"].shape
    O_pad = _round_up(O, LANE)
    C_pad = _round_up(C, LANE)

    # points head: lane-padded so kernel stores are unmasked 128-lane vst.
    w_out = jnp.zeros((H, O_pad), compute_dtype).at[:, :O].set(
        raw["w_out"].astype(compute_dtype))
    b_out = jnp.zeros((1, O_pad), jnp.float32).at[0, :O].set(
        raw["b_out"].astype(jnp.float32))

    # class head: cls = normalize(text_features @ w_class) computed ONCE in f32,
    # stored [H, C_pad] (contraction dim leading). Padded columns are exact zeros
    # (exactly representable in bf16) -> in-kernel LN invariant holds.
    cls = raw["text_features"].astype(jnp.float32) @ raw["w_class"].astype(jnp.float32)  # (C, H)
    cls = cls * jax.lax.rsqrt(jnp.maximum(jnp.sum(cls * cls, -1, keepdims=True), 1e-24))
    cls_hc = jnp.zeros((H, C_pad), compute_dtype).at[:, :C].set(cls.T.astype(compute_dtype))

    w_patch = raw["w_patch"].astype(compute_dtype)                                        # (H, H)
    gamma = jnp.zeros((1, C_pad), jnp.float32).at[0, :C].set(raw["ln_gamma"].astype(jnp.float32))
    beta = jnp.zeros((1, C_pad), jnp.float32).at[0, :C].set(raw["ln_beta"].astype(jnp.float32))

    return {"w_out": w_out, "b_out": b_out, "w_patch": w_patch, "cls_hc": cls_hc,
            "gamma": gamma, "beta": beta}


# ---------------------------------------------------------------------------
# Forward wrapper (jitted; only streams x — weights are pre-laid-out).
# ---------------------------------------------------------------------------
@functools.partial(jax.jit, static_argnames=("out_dim", "num_classes", "out_dtype"))
def spatial_temporal_seq2d_projector_forward(x_bnh, prepped, *, out_dim, num_classes,
                                             out_dtype=jnp.float32):
    """Returns {'pred_points': [B,N,P_T*P_J*in_chans], 'pred_logits': [B,N,num_classes]}."""
    B, N, H = x_bnh.shape
    O_pad = prepped["w_out"].shape[1]
    C_pad = prepped["cls_hc"].shape[1]
    BN = B * N
    x_flat = x_bnh.reshape(BN, H)                    # keep native activation dtype

    # ---- row tile: biggest that keeps double-buffered tiles within a budget that
    #      also fits v7x's 64 MiB physical VMEM (weights are tiny and resident). ----
    out_bytes = np.dtype(out_dtype).itemsize
    x_bytes = np.dtype(x_flat.dtype).itemsize
    per_row = 2 * (H * x_bytes + (O_pad + C_pad) * out_bytes) + 4 * (H + C_pad)
    tile_budget = 24 << 20
    max_rows = max(8, ((tile_budget // per_row) // 8) * 8)
    tm = int(min(1024, max_rows, _round_up(BN, 8)))

    bn_pad = _round_up(BN, tm)
    if bn_pad != BN:                                  # padded rows are zero -> finite, sliced away
        x_flat = jnp.zeros((bn_pad, H), x_flat.dtype).at[:BN].set(x_flat)
    n_tiles = bn_pad // tm

    def _nbytes(a):
        return int(a.size) * np.dtype(a.dtype).itemsize
    resident = sum(_nbytes(prepped[k]) for k in
                   ("w_out", "b_out", "w_patch", "cls_hc", "gamma", "beta"))
    vmem_need = 2 * resident + 2 * tm * per_row + (4 << 20)
    vmem_limit = int(min(max(vmem_need, 16 << 20), 56 << 20))

    kernel = functools.partial(fused_projector_kernel, num_classes=num_classes)
    pts_pad, logits_pad = pl.pallas_call(
        kernel,
        out_shape=(jax.ShapeDtypeStruct((bn_pad, O_pad), out_dtype),
                   jax.ShapeDtypeStruct((bn_pad, C_pad), out_dtype)),
        grid=(n_tiles,),
        in_specs=[
            # x: streamed per row-tile (double-buffered by the Pallas pipeline).
            # If DMA is still exposed on v7x, add pipeline_mode=pl.Buffered(3) here.
            pl.BlockSpec((tm, H), lambda i: (i, 0)),
            # weights / bias / class matrix / LN affine: constant index_map -> resident.
            pl.BlockSpec((H, O_pad), lambda i: (0, 0)),
            pl.BlockSpec((1, O_pad), lambda i: (0, 0)),
            pl.BlockSpec((H, H), lambda i: (0, 0)),
            pl.BlockSpec((H, C_pad), lambda i: (0, 0)),
            pl.BlockSpec((1, C_pad), lambda i: (0, 0)),
            pl.BlockSpec((1, C_pad), lambda i: (0, 0)),
        ],
        out_specs=(pl.BlockSpec((tm, O_pad), lambda i: (i, 0)),
                   pl.BlockSpec((tm, C_pad), lambda i: (i, 0))),
        compiler_params=pltpu.CompilerParams(
            dimension_semantics=("parallel",),        # megacore sharding on v7x
            vmem_limit_bytes=vmem_limit),
    )(x_flat, prepped["w_out"], prepped["b_out"], prepped["w_patch"],
      prepped["cls_hc"], prepped["gamma"], prepped["beta"])

    pred_points = pts_pad[:BN, :out_dim].reshape(B, N, out_dim)
    pred_logits = logits_pad[:BN, :num_classes].reshape(B, N, num_classes)
    return {"pred_points": pred_points, "pred_logits": pred_logits}


# ---------------------------------------------------------------------------
# Precision-matched pure-JAX reference (mirrors the PyTorch math; matmul operands
# rounded to the same compute dtype as the kernel, f32 accumulation / norm math).
# ---------------------------------------------------------------------------
def reference_forward(x, params, compute_dtype=jnp.float32):
    cd = compute_dtype
    f32 = jnp.float32

    def mm(a, b):
        return jax.lax.dot_general(a.astype(cd), b.astype(cd),
                                   (((a.ndim - 1,), (0,)), ((), ())),
                                   preferred_element_type=f32)

    pred_points = mm(x, params["w_out"]) + params["b_out"].astype(f32)

    txt = params["text_features"].astype(f32) @ params["w_class"].astype(f32)
    txt = txt / jnp.maximum(jnp.linalg.norm(txt, axis=-1, keepdims=True), 1e-12)
    p = mm(x, params["w_patch"])
    p = p / jnp.maximum(jnp.linalg.norm(p, axis=-1, keepdims=True), 1e-12)
    sim = jnp.einsum("bnd,cd->bnc", p.astype(cd), txt.astype(cd),
                     preferred_element_type=f32)
    mean = sim.mean(-1, keepdims=True)
    var = ((sim - mean) ** 2).mean(-1, keepdims=True)
    logits = (sim - mean) / jnp.sqrt(var + 1e-5) * params["ln_gamma"] + params["ln_beta"]
    return {"pred_points": pred_points, "pred_logits": logits}


if __name__ == "__main__":
    # --- module hyper-params (small, consistent with __init__) ---
    B = 2
    in_chans = 2
    num_joints = 8
    num_frames = 16
    hidden_dim = 32
    text_dim = 64
    num_classes = 4
    patch_size = (4, 2)
    stride_level = (1, 1)

    P_T = max(1, patch_size[0] // stride_level[0])          # 4
    P_J = max(1, patch_size[1] // stride_level[1])          # 2
    num_patches = ((num_frames - patch_size[0]) // P_T + 1) * (
        (num_joints - patch_size[1]) // P_J + 1
    )                                                        # 16
    out_dim = P_T * P_J * in_chans                           # 16
    N = num_patches

    # --- deterministic parameter init (synthetic; no checkpoint load) ---
    key = jax.random.PRNGKey(0)
    k = jax.random.split(key, 6)
    raw_params = {
        # output_proj: Linear(hidden_dim -> P_T*P_J*in_chans), stored pre-transposed [H, O]
        "w_out": jax.random.normal(k[0], (hidden_dim, out_dim), jnp.float32) * 0.02,
        "b_out": jax.random.normal(k[1], (out_dim,), jnp.float32) * 0.02,
        # class_proj: Linear(text_dim -> hidden_dim, bias=False), stored [T, H]
        "w_class": jax.random.normal(k[2], (text_dim, hidden_dim), jnp.float32) * 0.02,
        # patch_proj: Linear(hidden_dim -> hidden_dim, bias=False), stored [H, H]
        "w_patch": jax.random.normal(k[3], (hidden_dim, hidden_dim), jnp.float32) * 0.02,
        # text_features: [num_classes, text_dim] (frozen in torch; synthetic here)
        "text_features": jax.random.normal(k[4], (num_classes, text_dim), jnp.float32),
        # post_mul_norm = LayerNorm(num_classes): default affine init
        "ln_gamma": jnp.ones((num_classes,), jnp.float32),
        "ln_beta": jnp.zeros((num_classes,), jnp.float32),
    }

    # One-time weight re-layout + class-matrix precompute (bf16 MXU operands).
    compute_dtype = jnp.bfloat16
    prepped = prepare_projector_params(raw_params, compute_dtype=compute_dtype)

    # --- input: sparse_labeling token slice of the decoder output, [B, N, H] ---
    x = jax.random.normal(k[5], (B, N, hidden_dim), jnp.float32)

    out = spatial_temporal_seq2d_projector_forward(
        x, prepped, out_dim=out_dim, num_classes=num_classes)
    jax.block_until_ready(out)

    ref = reference_forward(x, raw_params, compute_dtype=compute_dtype)
    assert out["pred_points"].shape == (B, N, out_dim)
    assert out["pred_logits"].shape == (B, N, num_classes)
    assert jnp.allclose(out["pred_points"], ref["pred_points"], atol=1e-3, rtol=1e-3)
    assert jnp.allclose(out["pred_logits"], ref["pred_logits"], atol=5e-3, rtol=5e-3)

    print("KERNEL_OK")
</pallas_src>

<mosaic_0001>
module attributes {stable_mosaic.version = 11 : i64} {
  func.func @fused_projector_kernel(%arg0: i32, %arg1: memref<32x32xf32, #tpu.memory_space<vmem>>, %arg2: memref<32x128xbf16, #tpu.memory_space<vmem>>, %arg3: memref<1x128xf32, #tpu.memory_space<vmem>>, %arg4: memref<32x32xbf16, #tpu.memory_space<vmem>>, %arg5: memref<32x128xbf16, #tpu.memory_space<vmem>>, %arg6: memref<1x128xf32, #tpu.memory_space<vmem>>, %arg7: memref<1x128xf32, #tpu.memory_space<vmem>>, %arg8: memref<32x128xf32, #tpu.memory_space<vmem>>, %arg9: memref<32x128xf32, #tpu.memory_space<vmem>>) attributes {dimension_semantics = [#tpu.dimension_semantics<parallel>], iteration_bounds = array<i64: 1>, scalar_prefetch = 0 : i64, scratch_operands = 0 : i64, tpu.core_type = #tpu.core_type<tc>, window_params = [{transform_indices = @transform_0, window_bounds = array<i64: 32, 32>}, {pipeline_mode = #tpu.pipeline_mode<synchronous>, transform_indices = @transform_1, window_bounds = array<i64: 32, 128>}, {pipeline_mode = #tpu.pipeline_mode<synchronous>, transform_indices = @transform_2, window_bounds = array<i64: 1, 128>}, {pipeline_mode = #tpu.pipeline_mode<synchronous>, transform_indices = @transform_3, window_bounds = array<i64: 32, 32>}, {pipeline_mode = #tpu.pipeline_mode<synchronous>, transform_indices = @transform_4, window_bounds = array<i64: 32, 128>}, {pipeline_mode = #tpu.pipeline_mode<synchronous>, transform_indices = @transform_5, window_bounds = array<i64: 1, 128>}, {pipeline_mode = #tpu.pipeline_mode<synchronous>, transform_indices = @transform_6, window_bounds = array<i64: 1, 128>}, {transform_indices = @transform_7, window_bounds = array<i64: 32, 128>}, {transform_indices = @transform_8, window_bounds = array<i64: 32, 128>}]} {
    %c0 = arith.constant 0 : index
    %c0_0 = arith.constant 0 : index
    %0 = vector.load %arg1[%c0, %c0_0] : memref<32x32xf32, #tpu.memory_space<vmem>>, vector<32x32xf32>
    %1 = arith.truncf %0 : vector<32x32xf32> to vector<32x32xbf16>
    %c0_1 = arith.constant 0 : index
    %c0_2 = arith.constant 0 : index
    %2 = vector.load %arg2[%c0_1, %c0_2] : memref<32x128xbf16, #tpu.memory_space<vmem>>, vector<32x128xbf16>
    %cst = arith.constant dense<0.000000e+00> : vector<32x128xf32>
    %3 = tpu.matmul %1, %2, %cst {dimension_numbers = #tpu.dot_dimension_numbers<[1], [0], [0], [1], [0, 0, 1, 1], [], []>} : vector<32x32xbf16>, vector<32x128xbf16>, vector<32x128xf32> -> vector<32x128xf32>
    %c0_3 = arith.constant 0 : index
    %c0_4 = arith.constant 0 : index
    %4 = vector.load %arg3[%c0_3, %c0_4] : memref<1x128xf32, #tpu.memory_space<vmem>>, vector<1x128xf32>
    %5 = vector.broadcast %4 : vector<1x128xf32> to vector<32x128xf32>
    %6 = arith.addf %3, %5 : vector<32x128xf32>
    %c0_5 = arith.constant 0 : index
    %c0_6 = arith.constant 0 : index
    %7 = vector.load %arg8[%c0_5, %c0_6] : memref<32x128xf32, #tpu.memory_space<vmem>>, vector<32x128xf32>
    tpu.vector_store %arg8[%c0_5, %c0_6], %6 {strides = array<i32>} : memref<32x128xf32, #tpu.memory_space<vmem>>, vector<32x128xf32>,
    %c0_7 = arith.constant 0 : index
    %c0_8 = arith.constant 0 : index
    %8 = vector.load %arg4[%c0_7, %c0_8] : memref<32x32xbf16, #tpu.memory_space<vmem>>, vector<32x32xbf16>
    %cst_9 = arith.constant dense<0.000000e+00> : vector<32x32xf32>
    %9 = tpu.matmul %1, %8, %cst_9 {dimension_numbers = #tpu.dot_dimension_numbers<[1], [0], [0], [1], [0, 0, 1, 1], [], []>} : vector<32x32xbf16>, vector<32x32xbf16>, vector<32x32xf32> -> vector<32x32xf32>
    %10 = arith.mulf %9, %9 : vector<32x32xf32>
    %cst_10 = arith.constant dense<0.000000e+00> : vector<32xf32>
    %11 = vector.multi_reduction <add>, %10, %cst_10 [1] : vector<32x32xf32> to vector<32xf32>
    %12 = vector.shape_cast %11 : vector<32xf32> to vector<32x1xf32>
    %cst_11 = arith.constant 1.000000e-24 : f32
    %13 = vector.broadcast %cst_11 : f32 to vector<32x1xf32>
    %14 = arith.maximumf %12, %13 : vector<32x1xf32>
    %15 = math.rsqrt %14 : vector<32x1xf32>
    %16 = vector.broadcast %15 : vector<32x1xf32> to vector<32x32xf32>
    %17 = arith.mulf %9, %16 : vector<32x32xf32>
    %18 = arith.truncf %17 : vector<32x32xf32> to vector<32x32xbf16>
    %c0_12 = arith.constant 0 : index
    %c0_13 = arith.constant 0 : index
    %19 = vector.load %arg5[%c0_12, %c0_13] : memref<32x128xbf16, #tpu.memory_space<vmem>>, vector<32x128xbf16>
    %cst_14 = arith.constant dense<0.000000e+00> : vector<32x128xf32>
    %20 = tpu.matmul %18, %19, %cst_14 {dimension_numbers = #tpu.dot_dimension_numbers<[1], [0], [0], [1], [0, 0, 1, 1], [], []>} : vector<32x32xbf16>, vector<32x128xbf16>, vector<32x128xf32> -> vector<32x128xf32>
    %cst_15 = arith.constant dense<0.000000e+00> : vector<32xf32>
    %21 = vector.multi_reduction <add>, %20, %cst_15 [1] : vector<32x128xf32> to vector<32xf32>
    %22 = vector.shape_cast %21 : vector<32xf32> to vector<32x1xf32>
    %cst_16 = arith.constant 2.500000e-01 : f32
    %23 = vector.broadcast %cst_16 : f32 to vector<32x1xf32>
    %24 = arith.mulf %22, %23 : vector<32x1xf32>
    %25 = arith.mulf %20, %20 : vector<32x128xf32>
    %cst_17 = arith.constant dense<0.000000e+00> : vector<32xf32>
    %26 = vector.multi_reduction <add>, %25, %cst_17 [1] : vector<32x128xf32> to vector<32xf32>
    %27 = vector.shape_cast %26 : vector<32xf32> to vector<32x1xf32>
    %cst_18 = arith.constant 2.500000e-01 : f32
    %28 = vector.broadcast %cst_18 : f32 to vector<32x1xf32>
    %29 = arith.mulf %27, %28 : vector<32x1xf32>
    %30 = arith.mulf %24, %24 : vector<32x1xf32>
    %31 = arith.subf %29, %30 : vector<32x1xf32>
    %cst_19 = arith.constant 0.000000e+00 : f32
    %32 = vector.broadcast %cst_19 : f32 to vector<32x1xf32>
    %33 = arith.maximumf %31, %32 : vector<32x1xf32>
    %34 = vector.broadcast %24 : vector<32x1xf32> to vector<32x128xf32>
    %35 = arith.subf %20, %34 : vector<32x128xf32>
    %cst_20 = arith.constant 9.99999974E-6 : f32
    %36 = vector.broadcast %cst_20 : f32 to vector<32x1xf32>
    %37 = arith.addf %33, %36 : vector<32x1xf32>
    %38 = math.rsqrt %37 : vector<32x1xf32>
    %39 = vector.broadcast %38 : vector<32x1xf32> to vector<32x128xf32>
    %40 = arith.mulf %35, %39 : vector<32x128xf32>
    %c0_21 = arith.constant 0 : index
    %c0_22 = arith.constant 0 : index
    %41 = vector.load %arg6[%c0_21, %c0_22] : memref<1x128xf32, #tpu.memory_space<vmem>>, vector<1x128xf32>
    %42 = vector.broadcast %41 : vector<1x128xf32> to vector<32x128xf32>
    %43 = arith.mulf %40, %42 : vector<32x128xf32>
    %c0_23 = arith.constant 0 : index
    %c0_24 = arith.constant 0 : index
    %44 = vector.load %arg7[%c0_23, %c0_24] : memref<1x128xf32, #tpu.memory_space<vmem>>, vector<1x128xf32>
    %45 = vector.broadcast %44 : vector<1x128xf32> to vector<32x128xf32>
    %46 = arith.addf %43, %45 : vector<32x128xf32>
    %c0_25 = arith.constant 0 : index
    %c0_26 = arith.constant 0 : index
    %47 = vector.load %arg9[%c0_25, %c0_26] : memref<32x128xf32, #tpu.memory_space<vmem>>, vector<32x128xf32>
    tpu.vector_store %arg9[%c0_25, %c0_26], %46 {strides = array<i32>} : memref<32x128xf32, #tpu.memory_space<vmem>>, vector<32x128xf32>,
    return
  }
  func.func @transform_0(%arg0: i32) -> (i32, i32) {
    %c0_i32 = arith.constant 0 : i32
    %c0_i32_0 = arith.constant 0 : i32
    return %arg0, %c0_i32 : i32, i32
  }
  func.func @transform_1(%arg0: i32) -> (i32, i32) {
    %c0_i32 = arith.constant 0 : i32
    %c0_i32_0 = arith.constant 0 : i32
    %c0_i32_1 = arith.constant 0 : i32
    return %c0_i32, %c0_i32_0 : i32, i32
  }
  func.func @transform_2(%arg0: i32) -> (i32, i32) {
    %c0_i32 = arith.constant 0 : i32
    %c0_i32_0 = arith.constant 0 : i32
    %c0_i32_1 = arith.constant 0 : i32
    return %c0_i32, %c0_i32_0 : i32, i32
  }
  func.func @transform_3(%arg0: i32) -> (i32, i32) {
    %c0_i32 = arith.constant 0 : i32
    %c0_i32_0 = arith.constant 0 : i32
    %c0_i32_1 = arith.constant 0 : i32
    return %c0_i32, %c0_i32_0 : i32, i32
  }
  func.func @transform_4(%arg0: i32) -> (i32, i32) {
    %c0_i32 = arith.constant 0 : i32
    %c0_i32_0 = arith.constant 0 : i32
    %c0_i32_1 = arith.constant 0 : i32
    return %c0_i32, %c0_i32_0 : i32, i32
  }
  func.func @transform_5(%arg0: i32) -> (i32, i32) {
    %c0_i32 = arith.constant 0 : i32
    %c0_i32_0 = arith.constant 0 : i32
    %c0_i32_1 = arith.constant 0 : i32
    return %c0_i32, %c0_i32_0 : i32, i32
  }
  func.func @transform_6(%arg0: i32) -> (i32, i32) {
    %c0_i32 = arith.constant 0 : i32
    %c0_i32_0 = arith.constant 0 : i32
    %c0_i32_1 = arith.constant 0 : i32
    return %c0_i32, %c0_i32_0 : i32, i32
  }
  func.func @transform_7(%arg0: i32) -> (i32, i32) {
    %c0_i32 = arith.constant 0 : i32
    %c0_i32_0 = arith.constant 0 : i32
    return %arg0, %c0_i32 : i32, i32
  }
  func.func @transform_8(%arg0: i32) -> (i32, i32) {
    %c0_i32 = arith.constant 0 : i32
    %c0_i32_0 = arith.constant 0 : i32
    return %arg0, %c0_i32 : i32, i32
  }
}

</mosaic_0001>

<llo_original>
// kernel: spatial_temporal_seq2d_projector_forward.1
$region0: #{spatial_temporal_seq2d_projector_forward.1}
  #allocation0 [shape = 'u32[]', space=smem, size = 0x4, offset = 0x4, fixed_abs, tag = 'smem constant byte address 0x4 - core index']
  #allocation1 [shape = 'u32[72,128]{1,0:T(1,128)}', space=vmem, size = 0x9000, scoped, tag = 'internal scratch']
  %s0 = inlined_call_operand.hbm [shape: f32[32,32], index: 0, kind: input, shape index: {}]
  %s1 = inlined_call_operand.hbm [shape: bf16[32,128], index: 1, kind: input, shape index: {}]
  %s2 = inlined_call_operand.vmem [shape: f32[1,128], index: 2, kind: input, shape index: {}]
  %s3 = inlined_call_operand.hbm [shape: bf16[32,32], index: 3, kind: input, shape index: {}]
  %s4 = inlined_call_operand.hbm [shape: bf16[32,128], index: 4, kind: input, shape index: {}]
  %s5 = inlined_call_operand.vmem [shape: f32[1,128], index: 5, kind: input, shape index: {}]
  %s6 = inlined_call_operand.hbm [shape: f32[1,128], index: 6, kind: input, shape index: {}]
  %s7 = inlined_call_operand.hbm [shape: f32[32,128], index: 7, kind: output, shape index: {0}]
  %s8 = inlined_call_operand.vmem [shape: f32[32,128], index: 8, kind: output, shape index: {1}]
  %9 = xla_tuple %s7, %s8
  %s10 = sld [smem:[#allocation0]]
  $region66: #{spatial_temporal_seq2d_projector_forward.1} parent=0
    _
  %s12 = ssub.s32 1, %s10
  %s13 = scalar_select 0, %s12, %s10
  $region1: #{spatial_temporal_seq2d_projector_forward.1} parent=0
    #allocation2 [shape = 'u8[16384]{0}', space=vmem, size = 0x4000, scoped, tag = 'input window, operand 0, single buffered']
    #allocation3 [shape = 's32[1]{0}', space=sflag, size = 0x4, scoped, tag = 'scoped memory for spatial_temporal_seq2d_projector_forward.1']
    #allocation4 [shape = 's32[1]{0}', space=sflag, size = 0x4, scoped, tag = 'scoped memory for spatial_temporal_seq2d_projector_forward.1']
    #allocation5 [shape = 'u8[8192]{0}', space=vmem, size = 0x2000, scoped, tag = 'input window, operand 1, single buffered']
    #allocation6 [shape = 's32[1]{0}', space=sflag, size = 0x4, scoped, tag = 'scoped memory for spatial_temporal_seq2d_projector_forward.1']
    #allocation7 [shape = 'u8[8192]{0}', space=vmem, size = 0x2000, scoped, tag = 'input window, operand 3, single buffered']
    #allocation8 [shape = 'u8[8192]{0}', space=vmem, size = 0x2000, scoped, tag = 'input window, operand 4, single buffered']
    #allocation9 [shape = 's32[1]{0}', space=sflag, size = 0x4, scoped, tag = 'scoped memory for spatial_temporal_seq2d_projector_forward.1']
    #allocation10 [shape = 'u8[512]{0}', space=vmem, size = 0x400, scoped, tag = 'input window, operand 6, single buffered']
    #allocation11 [shape = 'u8[16384]{0}', space=vmem, size = 0x4000, scoped, tag = 'output window, operand 0, single buffered']
    %14 = vsyncpa [#allocation3], 0
    %15 = vsyncpa [#allocation6], 0
    %16 = vsyncpa [#allocation9], 0
    %17 = vsyncpa [#allocation4], 0
    // Predicated region
    $region2: #{spatial_temporal_seq2d_projector_forward.1} parent=1 // pred_check
      _
    $region3: #{spatial_temporal_seq2d_projector_forward.1} parent=1 // pred_check_branch
      %19 = sbr.rel (0) target = $region5
    $region4: #{spatial_temporal_seq2d_projector_forward.1} parent=1 // pred_region
      %21 = vsyncadd [#allocation3], 0
      %s22 = sshll.u32 %s0, 4
      %s23 = int_to_ptr.hbm [resolvable:$true] %s22
      %s24 = sshll.u32 [#allocation2], 4
      %s25 = int_to_ptr.vmem [resolvable:$true] %s24
      %30 = dma.hbm_to_vmem [thread:$0]  %s23, 512, %s25, [#allocation3], 128, 128, 8
    $region5: #{spatial_temporal_seq2d_projector_forward.1} parent=1 // pred_fallthru
      _
    // Predicated region
    $region6: #{spatial_temporal_seq2d_projector_forward.1} parent=1 // pred_check
      _
    $region7: #{spatial_temporal_seq2d_projector_forward.1} parent=1 // pred_check_branch
      %32 = sbr.rel (0) target = $region9
    $region8: #{spatial_temporal_seq2d_projector_forward.1} parent=1 // pred_region
      %34 = vsyncadd [#allocation6], 0
      %s35 = sshll.u32 %s1, 4
      %s36 = int_to_ptr.hbm [resolvable:$true] %s35
      %s37 = sshll.u32 [#allocation5], 4
      %s38 = int_to_ptr.vmem [resolvable:$true] %s37
      %43 = dma.hbm_to_vmem [thread:$0]  %s36, 256, %s38, [#allocation6], 64, 64, 4
    $region9: #{spatial_temporal_seq2d_projector_forward.1} parent=1 // pred_fallthru
      _
    // Predicated region
    $region10: #{spatial_temporal_seq2d_projector_forward.1} parent=1 // pred_check
      _
    $region11: #{spatial_temporal_seq2d_projector_forward.1} parent=1 // pred_check_branch
      %45 = sbr.rel (0) target = $region13
    $region12: #{spatial_temporal_seq2d_projector_forward.1} parent=1 // pred_region
      _
    $region13: #{spatial_temporal_seq2d_projector_forward.1} parent=1 // pred_fallthru
      _
    // Predicated region
    $region14: #{spatial_temporal_seq2d_projector_forward.1} parent=1 // pred_check
      _
    $region15: #{spatial_temporal_seq2d_projector_forward.1} parent=1 // pred_check_branch
      %47 = sbr.rel (0) target = $region17
    $region16: #{spatial_temporal_seq2d_projector_forward.1} parent=1 // pred_region
      %49 = vsyncadd [#allocation6], 0
      %s50 = sshll.u32 %s3, 4
      %s51 = int_to_ptr.hbm [resolvable:$true] %s50
      %s52 = sshll.u32 [#allocation7], 4
      %s53 = int_to_ptr.vmem [resolvable:$true] %s52
      %58 = dma.hbm_to_vmem [thread:$0]  %s51, 256, %s53, [#allocation6], 64, 64, 4
    $region17: #{spatial_temporal_seq2d_projector_forward.1} parent=1 // pred_fallthru
      _
    // Predicated region
    $region18: #{spatial_temporal_seq2d_projector_forward.1} parent=1 // pred_check
      _
    $region19: #{spatial_temporal_seq2d_projector_forward.1} parent=1 // pred_check_branch
      %60 = sbr.rel (0) target = $region21
    $region20: #{spatial_temporal_seq2d_projector_forward.1} parent=1 // pred_region
      %62 = vsyncadd [#allocation9], 0
      %s63 = sshll.u32 %s4, 4
      %s64 = int_to_ptr.hbm [resolvable:$true] %s63
      %s65 = sshll.u32 [#allocation8], 4
      %s66 = int_to_ptr.vmem [resolvable:$true] %s65
      %71 = dma.hbm_to_vmem [thread:$0]  %s64, 256, %s66, [#allocation9], 64, 64, 4
    $region21: #{spatial_temporal_seq2d_projector_forward.1} parent=1 // pred_fallthru
      _
    // Predicated region
    $region22: #{spatial_temporal_seq2d_projector_forward.1} parent=1 // pred_check
      _
    $region23: #{spatial_temporal_seq2d_projector_forward.1} parent=1 // pred_check_branch
      %73 = sbr.rel (0) target = $region25
    $region24: #{spatial_temporal_seq2d_projector_forward.1} parent=1 // pred_region
      _
    $region25: #{spatial_temporal_seq2d_projector_forward.1} parent=1 // pred_fallthru
      _
    // Predicated region
    $region26: #{spatial_temporal_seq2d_projector_forward.1} parent=1 // pred_check
      _
    $region27: #{spatial_temporal_seq2d_projector_forward.1} parent=1 // pred_check_branch
      %75 = sbr.rel (0) target = $region29
    $region28: #{spatial_temporal_seq2d_projector_forward.1} parent=1 // pred_region
      %77 = vsyncadd [#allocation9], 0
      %s79 = sshll.u32 %s6, 4
      %s80 = int_to_ptr.hbm [resolvable:$true] %s79
      %s81 = sshll.u32 [#allocation10], 4
      %s82 = int_to_ptr.vmem [resolvable:$true] %s81
      %84 = dma.hbm_to_vmem [thread:$0]  %s80, 16, %s82, [#allocation9]
    $region29: #{spatial_temporal_seq2d_projector_forward.1} parent=1 // pred_fallthru
      _
    // Predicated region
    $region30: #{spatial_temporal_seq2d_projector_forward.1} parent=1 // pred_check
      _
    $region31: #{spatial_temporal_seq2d_projector_forward.1} parent=1 // pred_check_branch
      %86 = sbr.rel (0) target = $region33
    $region32: #{spatial_temporal_seq2d_projector_forward.1} parent=1 // pred_region
      %88 = dma.done [#allocation3], 512
    $region33: #{spatial_temporal_seq2d_projector_forward.1} parent=1 // pred_fallthru
      _
    // Predicated region
    $region34: #{spatial_temporal_seq2d_projector_forward.1} parent=1 // pred_check
      _
    $region35: #{spatial_temporal_seq2d_projector_forward.1} parent=1 // pred_check_branch
      %90 = sbr.rel (0) target = $region37
    $region36: #{spatial_temporal_seq2d_projector_forward.1} parent=1 // pred_region
      %92 = dma.done [#allocation6], 256
    $region37: #{spatial_temporal_seq2d_projector_forward.1} parent=1 // pred_fallthru
      _
    // Predicated region
    $region38: #{spatial_temporal_seq2d_projector_forward.1} parent=1 // pred_check
      _
    $region39: #{spatial_temporal_seq2d_projector_forward.1} parent=1 // pred_check_branch
      %94 = sbr.rel (0) target = $region41
    $region40: #{spatial_temporal_seq2d_projector_forward.1} parent=1 // pred_region
      %96 = dma.done [#allocation6], 256
    $region41: #{spatial_temporal_seq2d_projector_forward.1} parent=1 // pred_fallthru
      _
    // Predicated region
    $region42: #{spatial_temporal_seq2d_projector_forward.1} parent=1 // pred_check
      _
    $region43: #{spatial_temporal_seq2d_projector_forward.1} parent=1 // pred_check_branch
      %98 = sbr.rel (0) target = $region45
    $region44: #{spatial_temporal_seq2d_projector_forward.1} parent=1 // pred_region
      %100 = dma.done [#allocation9], 256
    $region45: #{spatial_temporal_seq2d_projector_forward.1} parent=1 // pred_fallthru
      _
    // Predicated region
    $region46: #{spatial_temporal_seq2d_projector_forward.1} parent=1 // pred_check
      _
    $region47: #{spatial_temporal_seq2d_projector_forward.1} parent=1 // pred_check_branch
      %102 = sbr.rel (0) target = $region49
    $region48: #{spatial_temporal_seq2d_projector_forward.1} parent=1 // pred_region
      %104 = dma.done [#allocation9], 16
    $region49: #{spatial_temporal_seq2d_projector_forward.1} parent=1 // pred_fallthru
      _
    %v106 = vld [vmem:[#allocation2] sm:$0xff]
    %v107 = vld [vmem:[#allocation2 + $0x8] sm:$0xff]
    %v108 = vld [vmem:[#allocation2 + $0x10] sm:$0xff]
    %v109 = vld [vmem:[#allocation2 + $0x18] sm:$0xff]
    %v110 = vpack.c.bf16 %v107, %v106
    %v111 = vpack.c.bf16 %v109, %v108
    %v112 = vld [vmem:[#allocation5] sm:$0xf]
    %v113 = vld [vmem:[#allocation5 + $0x4] sm:$0xf]
    %v114 = vld [vmem:[#allocation5 + $0x8] sm:$0xf]
    %v115 = vld [vmem:[#allocation5 + $0xc] sm:$0xf]
    %v116 = vld [vmem:[%s2] sm:$0x1]
    %v118 = vperm.slane %v116, 0
    %v124 = vunpack.c.l.b16 %v112
    %v125 = vunpack.c.l.b16 %v113
    %v126 = vunpack.c.l.b16 %v114
    %v127 = vunpack.c.l.b16 %v115
    %v128 = vpack.c.b16 %v125, %v124
    %v129 = vpack.c.b16 %v127, %v126
    %vm132 = vcmask 261120
    %v134 = vsel %vm132, %v110, 0
    %v137 = vsel %vm132, %v111, 0
    %139 = vmatpush.bf16.msra.mxu0 0
    %140 = vmatpush.bf16.msra.mxu0 0
    %141 = vmatpush.bf16.msra.mxu0 0
    %142 = vmatpush.bf16.msra.mxu0 0
    %143 = vmatpush.bf16.msra.mxu0 0
    %144 = vmatpush.bf16.msra.mxu0 0
    %145 = vmatpush.bf16.msra.mxu0 %v129
    %146 = vmatpush.bf16.msra.mxu0 %v128
    %147 = vmatmul.bf16.gmra.mxu0 %v134
    %v148 = vpop.f32.mrf.mxu0
    %v149 = vadd.f32 %v118, %v148
    %v150 = vpop.f32.mrf.mxu0
    %v151 = vadd.f32 %v118, %v150
    %152 = vmatmul.bf16.gmra.mxu0 %v137
    %v153 = vpop.f32.mrf.mxu0
    %v154 = vadd.f32 %v118, %v153
    %v155 = vpop.f32.mrf.mxu0
    %v156 = vadd.f32 %v118, %v155
    %157 = vdwg.mxu0
    %158 = vst [vmem:[#allocation11] sm:$0xff] %v149
    %159 = vst [vmem:[#allocation11 + $0x8] sm:$0xff] %v151
    %160 = vst [vmem:[#allocation11 + $0x10] sm:$0xff] %v154
    %161 = vst [vmem:[#allocation11 + $0x18] sm:$0xff] %v156
    %v162 = vld [vmem:[#allocation7] sm:$0xf]
    %v163 = vld [vmem:[#allocation7 + $0x4] sm:$0xf]
    %v164 = vld [vmem:[#allocation7 + $0x8] sm:$0xf]
    %v165 = vld [vmem:[#allocation7 + $0xc] sm:$0xf]
    %v170 = vunpack.c.l.b16 %v162
    %v171 = vunpack.c.l.b16 %v163
    %v172 = vunpack.c.l.b16 %v164
    %v173 = vunpack.c.l.b16 %v165
    %v174 = vpack.c.b16 %v171, %v170
    %v175 = vpack.c.b16 %v173, %v172
    %178 = vmatpush.bf16.msra.mxu0 0
    %179 = vmatpush.bf16.msra.mxu0 0
    %180 = vmatpush.bf16.msra.mxu0 0
    %181 = vmatpush.bf16.msra.mxu0 0
    %182 = vmatpush.bf16.msra.mxu0 0
    %183 = vmatpush.bf16.msra.mxu0 0
    %184 = vmatpush.bf16.msra.mxu0 %v175
    %185 = vmatpush.bf16.msra.mxu0 %v174
    %186 = vmatmul.bf16.gmra.mxu0 %v134
    %v187 = vpop.f32.mrf.mxu0
    %v188 = vadd.f32 0.0, %v187
    %v189 = vpop.f32.mrf.mxu0
    %v190 = vadd.f32 0.0, %v189
    %191 = vmatmul.bf16.gmra.mxu0 %v137
    %v192 = vpop.f32.mrf.mxu0
    %v193 = vadd.f32 0.0, %v192
    %v194 = vpop.f32.mrf.mxu0
    %v195 = vadd.f32 0.0, %v194
    %196 = vdwg.mxu0
    %v197 = vmul.f32 %v188, %v188
    %v198 = vmul.f32 %v190, %v190
    %v199 = vmul.f32 %v193, %v193
    %v200 = vmul.f32 %v195, %v195
    %v201 = vsel %vm132, %v197, 0.0
    %202 = vadd.xlane.f32.xlu0 %v201
    %v203 = vpop.xlane.xlu0 %202
    %v204 = vsel %vm132, %v198, 0.0
    %205 = vadd.xlane.f32.xlu0 %v204
    %v206 = vpop.xlane.xlu0 %205
    %v207 = vsel %vm132, %v199, 0.0
    %208 = vadd.xlane.f32.xlu0 %v207
    %v209 = vpop.xlane.xlu0 %208
    %v210 = vsel %vm132, %v200, 0.0
    %211 = vadd.xlane.f32.xlu0 %v210
    %v212 = vpop.xlane.xlu0 %211
    %v213 = vmax.f32 %v203, 1e-24
    %v214 = vmax.f32 %v206, 1e-24
    %v215 = vmax.f32 %v209, 1e-24
    %v216 = vmax.f32 %v212, 1e-24
    %v217 = vrsqrt.pop %v213
    %v218 = vmul.f32 %v217, %v213
    %v219 = vmul.f32 %v218, %v217
    %v220 = vmul.f32 0.5, %v219
    %v221 = vsub.f32 1.5, %v220
    %v222 = vmul.f32 %v217, %v221
    %vm223 = vweird.f32 %v213
    %vm224 = vweird.f32 %v217
    %vm225 = vmor %vm223, %vm224
    %v226 = vsel %vm225, %v217, %v222
    %v227 = vrsqrt.pop %v214
    %v228 = vmul.f32 %v227, %v214
    %v229 = vmul.f32 %v228, %v227
    %v230 = vmul.f32 0.5, %v229
    %v231 = vsub.f32 1.5, %v230
    %v232 = vmul.f32 %v227, %v231
    %vm233 = vweird.f32 %v214
    %vm234 = vweird.f32 %v227
    %vm235 = vmor %vm233, %vm234
    %v236 = vsel %vm235, %v227, %v232
    %v237 = vrsqrt.pop %v215
    %v238 = vmul.f32 %v237, %v215
    %v239 = vmul.f32 %v238, %v237
    %v240 = vmul.f32 0.5, %v239
    %v241 = vsub.f32 1.5, %v240
    %v242 = vmul.f32 %v237, %v241
    %vm243 = vweird.f32 %v215
    %vm244 = vweird.f32 %v237
    %vm245 = vmor %vm243, %vm244
    %v246 = vsel %vm245, %v237, %v242
    %v247 = vrsqrt.pop %v216
    %v248 = vmul.f32 %v247, %v216
    %v249 = vmul.f32 %v248, %v247
    %v250 = vmul.f32 0.5, %v249
    %v251 = vsub.f32 1.5, %v250
    %v252 = vmul.f32 %v247, %v251
    %vm253 = vweird.f32 %v216
    %vm254 = vweird.f32 %v247
    %vm255 = vmor %vm253, %vm254
    %v256 = vsel %vm255, %v247, %v252
    %v257 = vmul.f32 %v188, %v226
    %v258 = vmul.f32 %v190, %v236
    %v259 = vmul.f32 %v193, %v246
    %v260 = vmul.f32 %v195, %v256
    %v261 = vpack.c.bf16 %v258, %v257
    %v262 = vpack.c.bf16 %v260, %v259
    %v263 = vld [vmem:[#allocation8] sm:$0xf]
    %v264 = vld [vmem:[#allocation8 + $0x4] sm:$0xf]
    %v265 = vld [vmem:[#allocation8 + $0x8] sm:$0xf]
    %v266 = vld [vmem:[#allocation8 + $0xc] sm:$0xf]
    %v271 = vunpack.c.l.b16 %v263
    %v272 = vunpack.c.l.b16 %v264
    %v273 = vunpack.c.l.b16 %v265
    %v274 = vunpack.c.l.b16 %v266
    %v275 = vpack.c.b16 %v272, %v271
    %v276 = vpack.c.b16 %v274, %v273
    %v280 = vsel %vm132, %v261, 0
    %v283 = vsel %vm132, %v262, 0
    %285 = vmatpush.bf16.msra.mxu0 0
    %286 = vmatpush.bf16.msra.mxu0 0
    %287 = vmatpush.bf16.msra.mxu0 0
    %288 = vmatpush.bf16.msra.mxu0 0
    %289 = vmatpush.bf16.msra.mxu0 0
    %290 = vmatpush.bf16.msra.mxu0 0
    %291 = vmatpush.bf16.msra.mxu0 %v276
    %292 = vmatpush.bf16.msra.mxu0 %v275
    %293 = vmatmul.bf16.gmra.mxu0 %v280
    %v294 = vpop.f32.mrf.mxu0
    %v295 = vadd.f32 0.0, %v294
    %v296 = vpop.f32.mrf.mxu0
    %v297 = vadd.f32 0.0, %v296
    %298 = vmatmul.bf16.gmra.mxu0 %v283
    %v299 = vpop.f32.mrf.mxu0
    %v300 = vadd.f32 0.0, %v299
    %v301 = vpop.f32.mrf.mxu0
    %v302 = vadd.f32 0.0, %v301
    %303 = vdwg.mxu0
    %304 = vadd.xlane.f32.xlu0 %v295
    %v305 = vpop.xlane.xlu0 %304
    %306 = vadd.xlane.f32.xlu0 %v297
    %v307 = vpop.xlane.xlu0 %306
    %308 = vadd.xlane.f32.xlu0 %v300
    %v309 = vpop.xlane.xlu0 %308
    %310 = vadd.xlane.f32.xlu0 %v302
    %v311 = vpop.xlane.xlu0 %310
    %v312 = vmul.f32 %v305, 0.25
    %v313 = vmul.f32 %v307, 0.25
    %v314 = vmul.f32 %v309, 0.25
    %v315 = vmul.f32 %v311, 0.25
    %v316 = vmul.f32 %v295, %v295
    %v317 = vmul.f32 %v297, %v297
    %v318 = vmul.f32 %v300, %v300
    %v319 = vmul.f32 %v302, %v302
    %320 = vadd.xlane.f32.xlu0 %v316
    %v321 = vpop.xlane.xlu0 %320
    %322 = vadd.xlane.f32.xlu0 %v317
    %v323 = vpop.xlane.xlu0 %322
    %324 = vadd.xlane.f32.xlu0 %v318
    %v325 = vpop.xlane.xlu0 %324
    %326 = vadd.xlane.f32.xlu0 %v319
    %v327 = vpop.xlane.xlu0 %326
    %v328 = vmul.f32 %v321, 0.25
    %v329 = vmul.f32 %v323, 0.25
    %v330 = vmul.f32 %v325, 0.25
    %v331 = vmul.f32 %v327, 0.25
    %v332 = vmul.f32 %v312, %v312
    %v333 = vmul.f32 %v313, %v313
    %v334 = vmul.f32 %v314, %v314
    %v335 = vmul.f32 %v315, %v315
    %v336 = vsub.f32 %v328, %v332
    %v337 = vsub.f32 %v329, %v333
    %v338 = vsub.f32 %v330, %v334
    %v339 = vsub.f32 %v331, %v335
    %v340 = vmax.f32 %v336, 0.0
    %v341 = vmax.f32 %v337, 0.0
    %v342 = vmax.f32 %v338, 0.0
    %v343 = vmax.f32 %v339, 0.0
    %v344 = vsub.f32 %v295, %v312
    %v345 = vsub.f32 %v297, %v313
    %v346 = vsub.f32 %v300, %v314
    %v347 = vsub.f32 %v302, %v315
    %v348 = vadd.f32 %v340, 1e-05
    %v349 = vadd.f32 %v341, 1e-05
    %v350 = vadd.f32 %v342, 1e-05
    %v351 = vadd.f32 %v343, 1e-05
    %v352 = vrsqrt.pop %v348
    %v353 = vmul.f32 %v352, %v348
    %v354 = vmul.f32 %v353, %v352
    %v355 = vmul.f32 0.5, %v354
    %v356 = vsub.f32 1.5, %v355
    %v357 = vmul.f32 %v352, %v356
    %vm358 = vweird.f32 %v348
    %vm359 = vweird.f32 %v352
    %vm360 = vmor %vm358, %vm359
    %v361 = vsel %vm360, %v352, %v357
    %v362 = vrsqrt.pop %v349
    %v363 = vmul.f32 %v362, %v349
    %v364 = vmul.f32 %v363, %v362
    %v365 = vmul.f32 0.5, %v364
    %v366 = vsub.f32 1.5, %v365
    %v367 = vmul.f32 %v362, %v366
    %vm368 = vweird.f32 %v349
    %vm369 = vweird.f32 %v362
    %vm370 = vmor %vm368, %vm369
    %v371 = vsel %vm370, %v362, %v367
    %v372 = vrsqrt.pop %v350
    %v373 = vmul.f32 %v372, %v350
    %v374 = vmul.f32 %v373, %v372
    %v375 = vmul.f32 0.5, %v374
    %v376 = vsub.f32 1.5, %v375
    %v377 = vmul.f32 %v372, %v376
    %vm378 = vweird.f32 %v350
    %vm379 = vweird.f32 %v372
    %vm380 = vmor %vm378, %vm379
    %v381 = vsel %vm380, %v372, %v377
    %v382 = vrsqrt.pop %v351
    %v383 = vmul.f32 %v382, %v351
    %v384 = vmul.f32 %v383, %v382
    %v385 = vmul.f32 0.5, %v384
    %v386 = vsub.f32 1.5, %v385
    %v387 = vmul.f32 %v382, %v386
    %vm388 = vweird.f32 %v351
    %vm389 = vweird.f32 %v382
    %vm390 = vmor %vm388, %vm389
    %v391 = vsel %vm390, %v382, %v387
    %v392 = vmul.f32 %v344, %v361
    %v393 = vmul.f32 %v345, %v371
    %v394 = vmul.f32 %v346, %v381
    %v395 = vmul.f32 %v347, %v391
    %v396 = vld [vmem:[%s5] sm:$0x1]
    %v398 = vperm.slane %v396, 0
    %v400 = vmul.f32 %v392, %v398
    %v401 = vmul.f32 %v393, %v398
    %v402 = vmul.f32 %v394, %v398
    %v403 = vmul.f32 %v395, %v398
    %v404 = vld [vmem:[#allocation10] sm:$0x1]
    %v406 = vperm.slane %v404, 0
    %v408 = vadd.f32 %v400, %v406
    %v409 = vadd.f32 %v401, %v406
    %v410 = vadd.f32 %v402, %v406
    %v411 = vadd.f32 %v403, %v406
    %412 = vst [vmem:[%s8] sm:$0xff] %v408
    %413 = vst [vmem:[%s8 + $0x8] sm:$0xff] %v409
    %414 = vst [vmem:[%s8 + $0x10] sm:$0xff] %v410
    %415 = vst [vmem:[%s8 + $0x18] sm:$0xff] %v411
    // Predicated region
    $region50: #{spatial_temporal_seq2d_projector_forward.1} parent=1 // pred_check
      _
    $region51: #{spatial_temporal_seq2d_projector_forward.1} parent=1 // pred_check_branch
      %417 = sbr.rel (0) target = $region53
    $region52: #{spatial_temporal_seq2d_projector_forward.1} parent=1 // pred_region
      %419 = vsyncadd [#allocation4], 0
      %s420 = sshll.u32 [#allocation11], 4
      %s421 = int_to_ptr.vmem [resolvable:$true] %s420
      %s422 = sshll.u32 %s7, 4
      %s423 = int_to_ptr.hbm [resolvable:$true] %s422
      %428 = dma.vmem_to_hbm [thread:$0]  %s421, 512, %s423, [#allocation4], 128, 128, 8
    $region53: #{spatial_temporal_seq2d_projector_forward.1} parent=1 // pred_fallthru
      _
    // Predicated region
    $region54: #{spatial_temporal_seq2d_projector_forward.1} parent=1 // pred_check
      _
    $region55: #{spatial_temporal_seq2d_projector_forward.1} parent=1 // pred_check_branch
      %430 = sbr.rel (0) target = $region57
    $region56: #{spatial_temporal_seq2d_projector_forward.1} parent=1 // pred_region
      _
    $region57: #{spatial_temporal_seq2d_projector_forward.1} parent=1 // pred_fallthru
      _
    // Predicated region
    $region58: #{spatial_temporal_seq2d_projector_forward.1} parent=1 // pred_check
      _
    $region59: #{spatial_temporal_seq2d_projector_forward.1} parent=1 // pred_check_branch
      %432 = sbr.rel (0) target = $region61
    $region60: #{spatial_temporal_seq2d_projector_forward.1} parent=1 // pred_region
      %434 = dma.done [#allocation4], 512
    $region61: #{spatial_temporal_seq2d_projector_forward.1} parent=1 // pred_fallthru
      _
    // Predicated region
    $region62: #{spatial_temporal_seq2d_projector_forward.1} parent=1 // pred_check
      _
    $region63: #{spatial_temporal_seq2d_projector_forward.1} parent=1 // pred_check_branch
      %436 = sbr.rel (0) target = $region65
    $region64: #{spatial_temporal_seq2d_projector_forward.1} parent=1 // pred_region
      _
    $region65: #{spatial_temporal_seq2d_projector_forward.1} parent=1 // pred_fallthru
      _
    %437 = vsyncpa [#allocation3], 1
    %438 = vsyncpa [#allocation6], 1
    %439 = vsyncpa [#allocation9], 1
    %440 = vsyncpa [#allocation4], 1

</llo_original>
